<compile_context>
chip_gen: v7x
topology: tpu7x:2x2x1
jax: 0.10.0
libtpu: 0.0.40
codegen_flags: <defaults>
</compile_context>

<pallas_src>
import functools
import math

import jax
import jax.numpy as jnp
from jax.experimental import pallas as pl
from jax.experimental.pallas import tpu as pltpu

LANE = 128  # vreg lane width; packed per-stack lane segments are padded to this


# ----------------------------- Pallas kernel ------------------------------ #

def _net_kernel(x_ref, a_ref, w1a_ref, wd1_ref, b1_ref,
                w2a_ref, wd2_ref, b2_ref, m2_ref, o_ref, *,
                kh_pad, ko_pad, num_layers):
    f32, bf16 = jnp.float32, jnp.bfloat16
    a = a_ref[...]                          # bf16 [N, N]  D^-1/2 A D^-1/2 (dense)
    x = x_ref[...].astype(bf16)             # [N, F_in]

    # ---- conv1 (act = ReLU every recursion step). K stacks live in lanes
    #      0..K*H-1, zero-padded to kh_pad=128 so init/root splits are aligned.
    pre = jnp.dot(x, w1a_ref[...], preferred_element_type=f32)        # [N, 2*kh_pad]
    root1 = pre[:, kh_pad:] + b1_ref[...]                             # f32: x@V_k + b_k
    h = jnp.maximum(
        jnp.dot(a, pre[:, :kh_pad].astype(bf16), preferred_element_type=f32) + root1,
        0.0)
    for _ in range(num_layers - 1):                                   # shared block-diag W
        hw = jnp.dot(h.astype(bf16), wd1_ref[...], preferred_element_type=f32)
        h = jnp.maximum(
            jnp.dot(a, hw.astype(bf16), preferred_element_type=f32) + root1, 0.0)

    # ---- conv1 stack mean + Net-level ReLU are folded into w2a on the host.
    #      (Valid only because conv1's per-step act is ReLU => h >= 0.)
    # ---- conv2 (act = identity)
    pre = jnp.dot(h.astype(bf16), w2a_ref[...], preferred_element_type=f32)  # [N, 2*ko_pad]
    root2 = pre[:, ko_pad:] + b2_ref[...]
    g = jnp.dot(a, pre[:, :ko_pad].astype(bf16), preferred_element_type=f32) + root2
    for _ in range(num_layers - 1):
        gw = jnp.dot(g.astype(bf16), wd2_ref[...], preferred_element_type=f32)
        g = jnp.dot(a, gw.astype(bf16), preferred_element_type=f32) + root2

    # ---- conv2 stack mean: single dot against the host-built averaging
    #      matrix (MXU idle here; avoids unaligned 24-lane slice adds).
    z = jnp.dot(g.astype(bf16), m2_ref[...], preferred_element_type=f32)     # [N, out_c]

    # ---- log_softmax over channels (dim=1), all f32 on VPU/EUP.
    m = jnp.max(z, axis=-1, keepdims=True)
    s = z - m
    lse = jnp.log(jnp.sum(jnp.exp(s), axis=-1, keepdims=True))
    o_ref[...] = s - lse


def net_forward(x, a_hat_bf16, packed, *, num_layers=2):
    """Fused eval-mode Net forward: dropout -> relu(conv1) -> dropout -> conv2 -> log_softmax."""
    n, f_in = x.shape
    kh_pad = packed["b1"].shape[1]
    ko_pad = packed["b2"].shape[1]
    out_c = packed["m2"].shape[1]
    kernel = functools.partial(_net_kernel, kh_pad=kh_pad, ko_pad=ko_pad,
                               num_layers=num_layers)

    operands = (x, a_hat_bf16, packed["w1a"], packed["wd1"], packed["b1"],
                packed["w2a"], packed["wd2"], packed["b2"], packed["m2"])

    # Rough cost hint so XLA schedules around the fused custom call correctly.
    mm = lambda m_, k_, n_: 2 * m_ * k_ * n_
    flops = (mm(n, f_in, 2 * kh_pad) + num_layers * mm(n, n, kh_pad)
             + (num_layers - 1) * mm(n, kh_pad, kh_pad)
             + mm(n, kh_pad, 2 * ko_pad) + num_layers * mm(n, n, ko_pad)
             + (num_layers - 1) * mm(n, ko_pad, ko_pad)
             + mm(n, ko_pad, out_c))
    nbytes = sum(math.prod(o.shape) * jnp.dtype(o.dtype).itemsize for o in operands)
    nbytes += n * out_c * 4

    vmem = lambda: pl.BlockSpec(memory_space=pltpu.MemorySpace.VMEM)
    # Grid-less fused call: every operand (< 300 KB total) is a whole-array
    # VMEM-resident block; hidden activations never leave VMEM/vregs.
    # TODO(synk): for large N, row-tile A_hat with a ("parallel",) node grid so
    #             both v7x TensorCores get work and the [N, N] block stays
    #             under v7x's 64 MiB VMEM; at N=64 a grid is pure overhead.
    return pl.pallas_call(
        kernel,
        out_shape=jax.ShapeDtypeStruct((n, out_c), jnp.float32),
        in_specs=[vmem() for _ in range(len(operands))],
        out_specs=vmem(),
        cost_estimate=pl.CostEstimate(flops=flops,
                                      transcendentals=n * (out_c + 1),
                                      bytes_accessed=nbytes),
    )(*operands)


# ------------------------- host-side (hoisted) prep ------------------------ #

def build_norm_adj(edge_index, num_nodes):
    """gcn_norm with add_self_loops=False, materialized dense: out = A_hat @ x
    with A_hat[col, row] = deg^-1/2[row] * deg^-1/2[col]."""
    row, col = edge_index[0], edge_index[1]
    ew = jnp.ones(row.shape[0], dtype=jnp.float32)
    deg = jnp.zeros((num_nodes,), jnp.float32).at[col].add(ew)
    dis = jnp.where(deg > 0, jax.lax.rsqrt(jnp.maximum(deg, 1e-12)), 0.0)
    norm = dis[row] * ew * dis[col]
    return jnp.zeros((num_nodes, num_nodes), jnp.float32).at[col, row].add(norm)


def _block_diag(mats):
    k = len(mats)
    r, c = mats[0].shape
    out = jnp.zeros((k * r, k * c), mats[0].dtype)
    for i, m in enumerate(mats):
        out = out.at[i * r:(i + 1) * r, i * c:(i + 1) * c].set(m)
    return out


def _pad_cols(m, cols):
    return jnp.pad(m, ((0, 0), (0, cols - m.shape[1])))


def pack_arma_weights(init_w, w, root_w, bias, *, lane_pad=LANE):
    """Collapse the K ARMA stacks into the lane axis, zero-padded to lane_pad
    so the [W_init_all | Root_all] split and all recursion slices are
    tile-aligned views.

      init_w [K,F_in,F_out], w [K,F_out,F_out], root_w [K,F_in,F_out], bias [K,1,F_out]
        -> wa [F_in, 2*lane_pad]   (fused t=0 matmul + root matmul)
           wd [lane_pad, lane_pad] (block-diagonal shared recursion weight, padded)
           b  [1, lane_pad]
    """
    k, _, f_out = init_w.shape
    kf = k * f_out
    if kf > lane_pad:
        # TODO(synk): past one 128-lane MXU tile the block-diag recursion weight
        #             wastes >2/3 of its MACs on zeros; fall back to per-stack
        #             [F_out,F_out] dots (or a grid over stacks) instead.
        raise NotImplementedError("K*F_out must fit one 128-lane MXU tile")
    w_init_all = _pad_cols(jnp.concatenate(list(init_w), axis=1), lane_pad)
    root_all = _pad_cols(jnp.concatenate(list(root_w), axis=1), lane_pad)
    wa = jnp.concatenate([w_init_all, root_all], axis=1)
    wd = jnp.pad(_block_diag(list(w)), ((0, lane_pad - kf), (0, lane_pad - kf)))
    b = _pad_cols(jnp.concatenate(list(bias), axis=1), lane_pad)
    return wa, wd, b


def _stack_mean_matrix(k, f, rows_pad):
    """M = (1/K) * vstack([I_f] * K), zero-padded to rows_pad rows."""
    m = jnp.concatenate([jnp.eye(f, dtype=jnp.float32)] * k, axis=0) / k
    return jnp.pad(m, ((0, rows_pad - k * f), (0, 0)))


def pack_params(params, *, num_stacks):
    p1, p2 = params["conv1"], params["conv2"]
    hid = p1["init_w"].shape[2]
    out_c = p2["init_w"].shape[2]
    w1a, wd1, b1 = pack_arma_weights(p1["init_w"], p1["w"], p1["root_w"], p1["bias"])
    w2a_raw, wd2, b2 = pack_arma_weights(p2["init_w"], p2["w"], p2["root_w"], p2["bias"])
    kh_pad, ko_pad = b1.shape[1], b2.shape[1]
    # Fold conv1's stack mean AND the Net-level ReLU into conv2's first matmul:
    # relu(mean_k h_k) == mean_k h_k == h @ M1 because conv1's per-step act is
    # ReLU (h >= 0).  So y @ w2a == h @ (M1 @ w2a).
    m1 = _stack_mean_matrix(num_stacks, hid, kh_pad)          # [kh_pad, hid]
    w2a = m1 @ w2a_raw                                        # [kh_pad, 2*ko_pad]
    # conv2's stack mean as a single dot in the kernel epilogue.
    m2 = _stack_mean_matrix(num_stacks, out_c, ko_pad)        # [ko_pad, out_c]
    bf = jnp.bfloat16                                         # MXU operands in bf16
    return {"w1a": w1a.astype(bf), "wd1": wd1.astype(bf), "b1": b1,
            "w2a": w2a.astype(bf), "wd2": wd2.astype(bf), "b2": b2,
            "m2": m2.astype(bf)}


def glorot(key, shape):
    fan_in, fan_out = shape[-2], shape[-1]
    lim = (6.0 / (fan_in + fan_out)) ** 0.5
    return jax.random.uniform(key, shape, jnp.float32, -lim, lim)


# --------------------------- pure-JAX reference ---------------------------- #

def ref_forward(x, a_hat, params, num_layers=2):
    def arma(x_in, p, act):
        root = jnp.einsum("nf,kfo->kno", x_in, p["root_w"]) + p["bias"]
        h = jnp.einsum("nf,kfo->kno", x_in, p["init_w"])
        h = act(jnp.einsum("nm,kmo->kno", a_hat, h) + root)
        for _ in range(num_layers - 1):
            h = jnp.einsum("kno,kop->knp", h, p["w"])
            h = act(jnp.einsum("nm,kmo->kno", a_hat, h) + root)
        return jnp.mean(h, axis=0)

    relu = lambda v: jnp.maximum(v, 0.0)
    h = relu(arma(x, params["conv1"], relu))
    z = arma(h, params["conv2"], lambda v: v)
    return jax.nn.log_softmax(z, axis=-1)


# ----------------------------------- main ---------------------------------- #

if __name__ == "__main__":
    key = jax.random.PRNGKey(0)
    N, E = 64, 256                  # nodes, edges
    IN_C, HID_C, OUT_C = 16, 32, 8  # in / hidden / out channels
    K = 3                           # num_stacks

    ks = jax.random.split(key, 10)
    x = jax.random.normal(ks[0], (N, IN_C), jnp.float32)
    edge_index = jax.random.randint(ks[1], (2, E), 0, N, dtype=jnp.int32)

    params = {
        "conv1": {
            "init_w": glorot(ks[2], (K, IN_C, HID_C)),
            "w":      glorot(ks[3], (K, HID_C, HID_C)),
            "root_w": glorot(ks[4], (K, IN_C, HID_C)),
            "bias":   jnp.zeros((K, 1, HID_C), jnp.float32),   # PyG resets bias to zeros
        },
        "conv2": {
            "init_w": glorot(ks[5], (K, HID_C, OUT_C)),
            "w":      glorot(ks[6], (K, OUT_C, OUT_C)),
            "root_w": glorot(ks[7], (K, HID_C, OUT_C)),
            "bias":   jnp.zeros((K, 1, OUT_C), jnp.float32),
        },
    }

    # Hoisted graph/weight-static preprocessing (once per graph / checkpoint).
    a_hat = build_norm_adj(edge_index, N)          # f32, used by the reference
    a_hat_bf16 = a_hat.astype(jnp.bfloat16)        # MXU operand for the kernel
    packed = pack_params(params, num_stacks=K)

    fwd = jax.jit(functools.partial(net_forward, num_layers=2))
    out = jax.block_until_ready(fwd(x, a_hat_bf16, packed))

    assert out.shape == (N, OUT_C)
    # log_softmax rows sum to ~1 in prob space
    assert bool(jnp.allclose(jnp.sum(jnp.exp(out), axis=1), 1.0, atol=1e-4))
    # match the unpacked per-stack pure-JAX reference (bf16-matmul tolerance)
    ref = ref_forward(x, a_hat, params)
    assert bool(jnp.allclose(out, ref, atol=2e-2, rtol=2e-2)), \
        float(jnp.max(jnp.abs(out - ref)))
    print("KERNEL_OK")
</pallas_src>

<mosaic_0001>
module attributes {stable_mosaic.version = 11 : i64} {
  func.func @_net_kernel(%arg0: memref<64x16xf32, #tpu.memory_space<vmem>>, %arg1: memref<64x64xbf16, #tpu.memory_space<vmem>>, %arg2: memref<16x256xbf16, #tpu.memory_space<vmem>>, %arg3: memref<128x128xbf16, #tpu.memory_space<vmem>>, %arg4: memref<1x128xf32, #tpu.memory_space<vmem>>, %arg5: memref<128x256xbf16, #tpu.memory_space<vmem>>, %arg6: memref<128x128xbf16, #tpu.memory_space<vmem>>, %arg7: memref<1x128xf32, #tpu.memory_space<vmem>>, %arg8: memref<128x8xbf16, #tpu.memory_space<vmem>>, %arg9: memref<64x8xf32, #tpu.memory_space<vmem>>) attributes {dimension_semantics = [], scalar_prefetch = 0 : i64, scratch_operands = 0 : i64, tpu.core_type = #tpu.core_type<tc>} {
    %c0 = arith.constant 0 : index
    %c0_0 = arith.constant 0 : index
    %0 = vector.load %arg1[%c0, %c0_0] : memref<64x64xbf16, #tpu.memory_space<vmem>>, vector<64x64xbf16>
    %c0_1 = arith.constant 0 : index
    %c0_2 = arith.constant 0 : index
    %1 = vector.load %arg0[%c0_1, %c0_2] : memref<64x16xf32, #tpu.memory_space<vmem>>, vector<64x16xf32>
    %2 = arith.truncf %1 : vector<64x16xf32> to vector<64x16xbf16>
    %c0_3 = arith.constant 0 : index
    %c0_4 = arith.constant 0 : index
    %3 = vector.load %arg2[%c0_3, %c0_4] : memref<16x256xbf16, #tpu.memory_space<vmem>>, vector<16x256xbf16>
    %cst = arith.constant dense<0.000000e+00> : vector<64x256xf32>
    %4 = tpu.matmul %2, %3, %cst {dimension_numbers = #tpu.dot_dimension_numbers<[1], [0], [0], [1], [0, 0, 1, 1], [], []>} : vector<64x16xbf16>, vector<16x256xbf16>, vector<64x256xf32> -> vector<64x256xf32>
    %5 = vector.extract_strided_slice %4 {offsets = [0, 128], sizes = [64, 128], strides = [1, 1]} : vector<64x256xf32> to vector<64x128xf32>
    %c0_5 = arith.constant 0 : index
    %c0_6 = arith.constant 0 : index
    %6 = vector.load %arg4[%c0_5, %c0_6] : memref<1x128xf32, #tpu.memory_space<vmem>>, vector<1x128xf32>
    %7 = vector.broadcast %6 : vector<1x128xf32> to vector<64x128xf32>
    %8 = arith.addf %5, %7 : vector<64x128xf32>
    %9 = vector.extract_strided_slice %4 {offsets = [0, 0], sizes = [64, 128], strides = [1, 1]} : vector<64x256xf32> to vector<64x128xf32>
    %10 = arith.truncf %9 : vector<64x128xf32> to vector<64x128xbf16>
    %cst_7 = arith.constant dense<0.000000e+00> : vector<64x128xf32>
    %11 = tpu.matmul %0, %10, %cst_7 {dimension_numbers = #tpu.dot_dimension_numbers<[1], [0], [0], [1], [0, 0, 1, 1], [], []>} : vector<64x64xbf16>, vector<64x128xbf16>, vector<64x128xf32> -> vector<64x128xf32>
    %12 = arith.addf %11, %8 : vector<64x128xf32>
    %cst_8 = arith.constant 0.000000e+00 : f32
    %13 = vector.broadcast %cst_8 : f32 to vector<64x128xf32>
    %14 = arith.maximumf %12, %13 : vector<64x128xf32>
    %15 = arith.truncf %14 : vector<64x128xf32> to vector<64x128xbf16>
    %c0_9 = arith.constant 0 : index
    %c0_10 = arith.constant 0 : index
    %16 = vector.load %arg3[%c0_9, %c0_10] : memref<128x128xbf16, #tpu.memory_space<vmem>>, vector<128x128xbf16>
    %cst_11 = arith.constant dense<0.000000e+00> : vector<64x128xf32>
    %17 = tpu.matmul %15, %16, %cst_11 {dimension_numbers = #tpu.dot_dimension_numbers<[1], [0], [0], [1], [0, 0, 1, 1], [], []>} : vector<64x128xbf16>, vector<128x128xbf16>, vector<64x128xf32> -> vector<64x128xf32>
    %18 = arith.truncf %17 : vector<64x128xf32> to vector<64x128xbf16>
    %cst_12 = arith.constant dense<0.000000e+00> : vector<64x128xf32>
    %19 = tpu.matmul %0, %18, %cst_12 {dimension_numbers = #tpu.dot_dimension_numbers<[1], [0], [0], [1], [0, 0, 1, 1], [], []>} : vector<64x64xbf16>, vector<64x128xbf16>, vector<64x128xf32> -> vector<64x128xf32>
    %20 = arith.addf %19, %8 : vector<64x128xf32>
    %cst_13 = arith.constant 0.000000e+00 : f32
    %21 = vector.broadcast %cst_13 : f32 to vector<64x128xf32>
    %22 = arith.maximumf %20, %21 : vector<64x128xf32>
    %23 = arith.truncf %22 : vector<64x128xf32> to vector<64x128xbf16>
    %c0_14 = arith.constant 0 : index
    %c0_15 = arith.constant 0 : index
    %24 = vector.load %arg5[%c0_14, %c0_15] : memref<128x256xbf16, #tpu.memory_space<vmem>>, vector<128x256xbf16>
    %cst_16 = arith.constant dense<0.000000e+00> : vector<64x256xf32>
    %25 = tpu.matmul %23, %24, %cst_16 {dimension_numbers = #tpu.dot_dimension_numbers<[1], [0], [0], [1], [0, 0, 1, 1], [], []>} : vector<64x128xbf16>, vector<128x256xbf16>, vector<64x256xf32> -> vector<64x256xf32>
    %26 = vector.extract_strided_slice %25 {offsets = [0, 128], sizes = [64, 128], strides = [1, 1]} : vector<64x256xf32> to vector<64x128xf32>
    %c0_17 = arith.constant 0 : index
    %c0_18 = arith.constant 0 : index
    %27 = vector.load %arg7[%c0_17, %c0_18] : memref<1x128xf32, #tpu.memory_space<vmem>>, vector<1x128xf32>
    %28 = vector.broadcast %27 : vector<1x128xf32> to vector<64x128xf32>
    %29 = arith.addf %26, %28 : vector<64x128xf32>
    %30 = vector.extract_strided_slice %25 {offsets = [0, 0], sizes = [64, 128], strides = [1, 1]} : vector<64x256xf32> to vector<64x128xf32>
    %31 = arith.truncf %30 : vector<64x128xf32> to vector<64x128xbf16>
    %cst_19 = arith.constant dense<0.000000e+00> : vector<64x128xf32>
    %32 = tpu.matmul %0, %31, %cst_19 {dimension_numbers = #tpu.dot_dimension_numbers<[1], [0], [0], [1], [0, 0, 1, 1], [], []>} : vector<64x64xbf16>, vector<64x128xbf16>, vector<64x128xf32> -> vector<64x128xf32>
    %33 = arith.addf %32, %29 : vector<64x128xf32>
    %34 = arith.truncf %33 : vector<64x128xf32> to vector<64x128xbf16>
    %c0_20 = arith.constant 0 : index
    %c0_21 = arith.constant 0 : index
    %35 = vector.load %arg6[%c0_20, %c0_21] : memref<128x128xbf16, #tpu.memory_space<vmem>>, vector<128x128xbf16>
    %cst_22 = arith.constant dense<0.000000e+00> : vector<64x128xf32>
    %36 = tpu.matmul %34, %35, %cst_22 {dimension_numbers = #tpu.dot_dimension_numbers<[1], [0], [0], [1], [0, 0, 1, 1], [], []>} : vector<64x128xbf16>, vector<128x128xbf16>, vector<64x128xf32> -> vector<64x128xf32>
    %37 = arith.truncf %36 : vector<64x128xf32> to vector<64x128xbf16>
    %cst_23 = arith.constant dense<0.000000e+00> : vector<64x128xf32>
    %38 = tpu.matmul %0, %37, %cst_23 {dimension_numbers = #tpu.dot_dimension_numbers<[1], [0], [0], [1], [0, 0, 1, 1], [], []>} : vector<64x64xbf16>, vector<64x128xbf16>, vector<64x128xf32> -> vector<64x128xf32>
    %39 = arith.addf %38, %29 : vector<64x128xf32>
    %40 = arith.truncf %39 : vector<64x128xf32> to vector<64x128xbf16>
    %c0_24 = arith.constant 0 : index
    %c0_25 = arith.constant 0 : index
    %41 = vector.load %arg8[%c0_24, %c0_25] : memref<128x8xbf16, #tpu.memory_space<vmem>>, vector<128x8xbf16>
    %cst_26 = arith.constant dense<0.000000e+00> : vector<64x8xf32>
    %42 = tpu.matmul %40, %41, %cst_26 {dimension_numbers = #tpu.dot_dimension_numbers<[1], [0], [0], [1], [0, 0, 1, 1], [], []>} : vector<64x128xbf16>, vector<128x8xbf16>, vector<64x8xf32> -> vector<64x8xf32>
    %cst_27 = arith.constant dense<0xFF800000> : vector<64xf32>
    %43 = vector.multi_reduction <maximumf>, %42, %cst_27 [1] : vector<64x8xf32> to vector<64xf32>
    %44 = vector.shape_cast %43 : vector<64xf32> to vector<64x1xf32>
    %45 = vector.broadcast %44 : vector<64x1xf32> to vector<64x8xf32>
    %46 = arith.subf %42, %45 : vector<64x8xf32>
    %47 = math.exp %46 : vector<64x8xf32>
    %cst_28 = arith.constant dense<0.000000e+00> : vector<64xf32>
    %48 = vector.multi_reduction <add>, %47, %cst_28 [1] : vector<64x8xf32> to vector<64xf32>
    %49 = vector.shape_cast %48 : vector<64xf32> to vector<64x1xf32>
    %50 = math.log %49 : vector<64x1xf32>
    %51 = vector.broadcast %50 : vector<64x1xf32> to vector<64x8xf32>
    %52 = arith.subf %46, %51 : vector<64x8xf32>
    %c0_29 = arith.constant 0 : index
    %c0_30 = arith.constant 0 : index
    %53 = vector.load %arg9[%c0_29, %c0_30] : memref<64x8xf32, #tpu.memory_space<vmem>>, vector<64x8xf32>
    tpu.vector_store %arg9[%c0_29, %c0_30], %52 {strides = array<i32>} : memref<64x8xf32, #tpu.memory_space<vmem>>, vector<64x8xf32>,
    return
  }
}

</mosaic_0001>

<llo_original>
// kernel: net_forward.1
$region0: #{net_forward.1}
  #allocation0 [shape = 'u32[]', space=smem, size = 0x4, offset = 0x4, fixed_abs, tag = 'smem constant byte address 0x4 - core index']
  #allocation1 [shape = 'u32[144,128]{1,0:T(1,128)}', space=vmem, size = 0x12000, scoped, tag = 'internal scratch']
  %s0 = inlined_call_operand.vmem [shape: f32[64,16], index: 0, kind: input, shape index: {}]
  %s1 = inlined_call_operand.vmem [shape: bf16[64,64], index: 1, kind: input, shape index: {}]
  %s2 = inlined_call_operand.hbm [shape: bf16[16,256], index: 2, kind: input, shape index: {}]
  %s3 = inlined_call_operand.hbm [shape: bf16[128,128], index: 3, kind: input, shape index: {}]
  %s4 = inlined_call_operand.vmem [shape: f32[1,128], index: 4, kind: input, shape index: {}]
  %s5 = inlined_call_operand.vmem [shape: bf16[128,256], index: 5, kind: input, shape index: {}]
  %s6 = inlined_call_operand.hbm [shape: bf16[128,128], index: 6, kind: input, shape index: {}]
  %s7 = inlined_call_operand.vmem [shape: f32[1,128], index: 7, kind: input, shape index: {}]
  %s8 = inlined_call_operand.vmem [shape: bf16[128,8], index: 8, kind: input, shape index: {}]
  %s9 = inlined_call_operand.vmem [shape: f32[64,8], index: 9, kind: output, shape index: {}]
  %s10 = sld [smem:[#allocation0]]
  $region58: #{net_forward.1} parent=0
    _
  %s12 = ssub.s32 1, %s10
  %s13 = scalar_select 0, %s12, %s10
  $region1: #{net_forward.1} parent=0
    #allocation2 [shape = 'u8[8192]{0}', space=vmem, size = 0x2000, scoped, tag = 'input window, operand 2, single buffered']
    #allocation3 [shape = 's32[1]{0}', space=sflag, size = 0x4, scoped, tag = 'scoped memory for net_forward.1']
    #allocation4 [shape = 'u8[32768]{0}', space=vmem, size = 0x8000, scoped, tag = 'input window, operand 3, single buffered']
    #allocation5 [shape = 's32[1]{0}', space=sflag, size = 0x4, scoped, tag = 'scoped memory for net_forward.1']
    #allocation6 [shape = 'u8[32768]{0}', space=vmem, size = 0x8000, scoped, tag = 'input window, operand 6, single buffered']
    %14 = vsyncpa [#allocation3], 0
    %15 = vsyncpa [#allocation5], 0
    // Predicated region
    $region2: #{net_forward.1} parent=1 // pred_check
      _
    $region3: #{net_forward.1} parent=1 // pred_check_branch
      %17 = sbr.rel (0) target = $region5
    $region4: #{net_forward.1} parent=1 // pred_region
      _
    $region5: #{net_forward.1} parent=1 // pred_fallthru
      _
    // Predicated region
    $region6: #{net_forward.1} parent=1 // pred_check
      _
    $region7: #{net_forward.1} parent=1 // pred_check_branch
      %19 = sbr.rel (0) target = $region9
    $region8: #{net_forward.1} parent=1 // pred_region
      _
    $region9: #{net_forward.1} parent=1 // pred_fallthru
      _
    // Predicated region
    $region10: #{net_forward.1} parent=1 // pred_check
      _
    $region11: #{net_forward.1} parent=1 // pred_check_branch
      %21 = sbr.rel (0) target = $region13
    $region12: #{net_forward.1} parent=1 // pred_region
      %s23 = ssub.s32 256, 256
      %24 = vsyncadd [#allocation3], %s23
      %s25 = sshll.u32 [#allocation2], 4
      %s26 = int_to_ptr.vmem [resolvable:$true] %s25
      %31 = dma.hbm_to_vmem [thread:$0]  %s2, 256, %s26, [#allocation3], 128, 128, 8
    $region13: #{net_forward.1} parent=1 // pred_fallthru
      _
    // Predicated region
    $region14: #{net_forward.1} parent=1 // pred_check
      _
    $region15: #{net_forward.1} parent=1 // pred_check_branch
      %33 = sbr.rel (0) target = $region17
    $region16: #{net_forward.1} parent=1 // pred_region
      %s35 = ssub.s32 1024, 1024
      %36 = vsyncadd [#allocation5], %s35
      %s37 = sshll.u32 [#allocation4], 4
      %s38 = int_to_ptr.vmem [resolvable:$true] %s37
      %43 = dma.hbm_to_vmem [thread:$0]  %s3, 1024, %s38, [#allocation5], 64, 64, 4
    $region17: #{net_forward.1} parent=1 // pred_fallthru
      _
    // Predicated region
    $region18: #{net_forward.1} parent=1 // pred_check
      _
    $region19: #{net_forward.1} parent=1 // pred_check_branch
      %45 = sbr.rel (0) target = $region21
    $region20: #{net_forward.1} parent=1 // pred_region
      _
    $region21: #{net_forward.1} parent=1 // pred_fallthru
      _
    // Predicated region
    $region22: #{net_forward.1} parent=1 // pred_check
      _
    $region23: #{net_forward.1} parent=1 // pred_check_branch
      %47 = sbr.rel (0) target = $region25
    $region24: #{net_forward.1} parent=1 // pred_region
      _
    $region25: #{net_forward.1} parent=1 // pred_fallthru
      _
    // Predicated region
    $region26: #{net_forward.1} parent=1 // pred_check
      _
    $region27: #{net_forward.1} parent=1 // pred_check_branch
      %49 = sbr.rel (0) target = $region29
    $region28: #{net_forward.1} parent=1 // pred_region
      %s51 = ssub.s32 1024, 1024
      %52 = vsyncadd [#allocation5], %s51
      %s53 = sshll.u32 [#allocation6], 4
      %s54 = int_to_ptr.vmem [resolvable:$true] %s53
      %59 = dma.hbm_to_vmem [thread:$0]  %s6, 1024, %s54, [#allocation5], 64, 64, 4
    $region29: #{net_forward.1} parent=1 // pred_fallthru
      _
    // Predicated region
    $region30: #{net_forward.1} parent=1 // pred_check
      _
    $region31: #{net_forward.1} parent=1 // pred_check_branch
      %61 = sbr.rel (0) target = $region33
    $region32: #{net_forward.1} parent=1 // pred_region
      _
    $region33: #{net_forward.1} parent=1 // pred_fallthru
      _
    // Predicated region
    $region34: #{net_forward.1} parent=1 // pred_check
      _
    $region35: #{net_forward.1} parent=1 // pred_check_branch
      %63 = sbr.rel (0) target = $region37
    $region36: #{net_forward.1} parent=1 // pred_region
      _
    $region37: #{net_forward.1} parent=1 // pred_fallthru
      _
    // Predicated region
    $region38: #{net_forward.1} parent=1 // pred_check
      _
    $region39: #{net_forward.1} parent=1 // pred_check_branch
      %65 = sbr.rel (0) target = $region41
    $region40: #{net_forward.1} parent=1 // pred_region
      %66 = dma.done [#allocation3], 256
    $region41: #{net_forward.1} parent=1 // pred_fallthru
      _
    // Predicated region
    $region42: #{net_forward.1} parent=1 // pred_check
      _
    $region43: #{net_forward.1} parent=1 // pred_check_branch
      %68 = sbr.rel (0) target = $region45
    $region44: #{net_forward.1} parent=1 // pred_region
      %69 = dma.done [#allocation5], 1024
    $region45: #{net_forward.1} parent=1 // pred_fallthru
      _
    // Predicated region
    $region46: #{net_forward.1} parent=1 // pred_check
      _
    $region47: #{net_forward.1} parent=1 // pred_check_branch
      %71 = sbr.rel (0) target = $region49
    $region48: #{net_forward.1} parent=1 // pred_region
      %72 = dma.done [#allocation5], 1024
    $region49: #{net_forward.1} parent=1 // pred_fallthru
      _
    %v74 = vld [vmem:[%s1] sm:$0xf]
    %v75 = vld [vmem:[%s1 + $0x4] sm:$0xf]
    %v76 = vld [vmem:[%s1 + $0x8] sm:$0xf]
    %v77 = vld [vmem:[%s1 + $0xc] sm:$0xf]
    %v78 = vld [vmem:[%s1 + $0x10] sm:$0xf]
    %v79 = vld [vmem:[%s1 + $0x14] sm:$0xf]
    %v80 = vld [vmem:[%s1 + $0x18] sm:$0xf]
    %v81 = vld [vmem:[%s1 + $0x1c] sm:$0xf]
    %v82 = vld [vmem:[%s0] sm:$0xff]
    %v83 = vld [vmem:[%s0 + $0x8] sm:$0xff]
    %v84 = vld [vmem:[%s0 + $0x10] sm:$0xff]
    %v85 = vld [vmem:[%s0 + $0x18] sm:$0xff]
    %v86 = vld [vmem:[%s0 + $0x20] sm:$0xff]
    %v87 = vld [vmem:[%s0 + $0x28] sm:$0xff]
    %v88 = vld [vmem:[%s0 + $0x30] sm:$0xff]
    %v89 = vld [vmem:[%s0 + $0x38] sm:$0xff]
    %v90 = vpack.c.bf16 %v83, %v82
    %v91 = vpack.c.bf16 %v85, %v84
    %v92 = vpack.c.bf16 %v87, %v86
    %v93 = vpack.c.bf16 %v89, %v88
    %v94 = vld [vmem:[#allocation2] sm:$0xff]
    %v95 = vld [vmem:[#allocation2 + $0x8] sm:$0xff]
    %v98 = vunpack.c.l.b16 %v94
    %v99 = vunpack.c.h.b16 %v94
    %v100 = vunpack.c.l.b16 %v95
    %v101 = vunpack.c.h.b16 %v95
    %v102 = vpack.c.b16 %v100, %v98
    %v103 = vpack.c.b16 %v101, %v99
    %vm106 = vcmask 130048
    %v108 = vsel %vm106, %v90, 0
    %v111 = vsel %vm106, %v91, 0
    %v114 = vsel %vm106, %v92, 0
    %v117 = vsel %vm106, %v93, 0
    %119 = vmatprep.subr.bf16.mxu0 %v103
    %120 = vmatpush1.bf16.msra.mxu0 %v102
    %121 = vmatprep.subr.bf16.mxu0 0
    %122 = vmatpush1.bf16.msra.mxu0 0
    %123 = vmatprep.subr.bf16.mxu0 0
    %124 = vmatpush1.bf16.msra.mxu0 0
    %125 = vmatprep.subr.bf16.mxu0 0
    %126 = vmatpush1.bf16.msra.mxu0 0
    %127 = vmatprep.subr.bf16.mxu0 0
    %128 = vmatpush1.bf16.msra.mxu0 0
    %129 = vmatprep.subr.bf16.mxu0 0
    %130 = vmatpush1.bf16.msra.mxu0 0
    %131 = vmatprep.subr.bf16.mxu0 0
    %132 = vmatpush1.bf16.msra.mxu0 0
    %133 = vmatprep.subr.bf16.mxu0 0
    %134 = vmatpush1.bf16.msra.mxu0 0
    %135 = vmatprep.subr.bf16.mxu0 0
    %136 = vmatpush1.bf16.msra.mxu0 0
    %137 = vmatprep.subr.bf16.mxu0 0
    %138 = vmatpush1.bf16.msra.mxu0 0
    %139 = vmatprep.subr.bf16.mxu0 0
    %140 = vmatpush1.bf16.msra.mxu0 0
    %141 = vmatprep.subr.bf16.mxu0 0
    %142 = vmatpush1.bf16.msra.mxu0 0
    %143 = vmatprep.subr.bf16.mxu0 0
    %144 = vmatpush1.bf16.msra.mxu0 0
    %145 = vmatprep.subr.bf16.mxu0 0
    %146 = vmatpush1.bf16.msra.mxu0 0
    %147 = vmatprep.subr.bf16.mxu0 0
    %148 = vmatpush1.bf16.msra.mxu0 0
    %149 = vmatprep.subr.bf16.mxu0 0
    %150 = vmatpush1.bf16.msra.mxu0 0
    %151 = vmatprep.mubr.bf16.mxu0 0
    %152 = vmatmul.mubr.bf16.gmra.mrb[0].mxu0 %v108
    %v153 = vpop.f32.mrb[0].mxu0
    %v154 = vadd.f32 0.0, %v153
    %v155 = vpop.f32.mrb[0].mxu0
    %v156 = vadd.f32 0.0, %v155
    %v157 = vpop.f32.mrb[0].mxu0
    %v158 = vadd.f32 0.0, %v157
    %v159 = vpop.f32.mrb[0].mxu0
    %v160 = vadd.f32 0.0, %v159
    %161 = vmatprep.mubr.bf16.mxu0 0
    %162 = vmatmul.mubr.bf16.gmra.mrb[0].mxu0 %v111
    %v163 = vpop.f32.mrb[0].mxu0
    %v164 = vadd.f32 0.0, %v163
    %v165 = vpop.f32.mrb[0].mxu0
    %v166 = vadd.f32 0.0, %v165
    %v167 = vpop.f32.mrb[0].mxu0
    %v168 = vadd.f32 0.0, %v167
    %v169 = vpop.f32.mrb[0].mxu0
    %v170 = vadd.f32 0.0, %v169
    %171 = vmatprep.mubr.bf16.mxu0 0
    %172 = vmatmul.mubr.bf16.gmra.mrb[0].mxu0 %v114
    %v173 = vpop.f32.mrb[0].mxu0
    %v174 = vadd.f32 0.0, %v173
    %v175 = vpop.f32.mrb[0].mxu0
    %v176 = vadd.f32 0.0, %v175
    %v177 = vpop.f32.mrb[0].mxu0
    %v178 = vadd.f32 0.0, %v177
    %v179 = vpop.f32.mrb[0].mxu0
    %v180 = vadd.f32 0.0, %v179
    %181 = vmatprep.mubr.bf16.mxu0 0
    %182 = vmatmul.mubr.bf16.gmra.mrb[0].mxu0 %v117
    %v183 = vpop.f32.mrb[0].mxu0
    %v184 = vadd.f32 0.0, %v183
    %v185 = vpop.f32.mrb[0].mxu0
    %v186 = vadd.f32 0.0, %v185
    %v187 = vpop.f32.mrb[0].mxu0
    %v188 = vadd.f32 0.0, %v187
    %v189 = vpop.f32.mrb[0].mxu0
    %v190 = vadd.f32 0.0, %v189
    %191 = vdwg.mxu0
    %v192 = vld [vmem:[%s4] sm:$0x1]
    %v194 = vlaneseq
    %v195 = vshrl.u32 %v194, 7
    %v196 = vsub.s32 0, %v195
    %v197 = vrot.slane %v192, %v196
    %v199 = vadd.f32 %v156, %v197
    %v200 = vadd.f32 %v160, %v197
    %v201 = vadd.f32 %v166, %v197
    %v202 = vadd.f32 %v170, %v197
    %v203 = vadd.f32 %v176, %v197
    %v204 = vadd.f32 %v180, %v197
    %v205 = vadd.f32 %v186, %v197
    %v206 = vadd.f32 %v190, %v197
    %v207 = vpack.c.bf16 %v158, %v154
    %v208 = vpack.c.bf16 %v168, %v164
    %v209 = vpack.c.bf16 %v178, %v174
    %v210 = vpack.c.bf16 %v188, %v184
    %v219 = vunpack.c.l.b16 %v74
    %v220 = vunpack.c.l.b16 %v75
    %v221 = vunpack.c.l.b16 %v76
    %v222 = vunpack.c.l.b16 %v77
    %v223 = vunpack.c.l.b16 %v78
    %v224 = vunpack.c.l.b16 %v79
    %v225 = vunpack.c.l.b16 %v80
    %v226 = vunpack.c.l.b16 %v81
    %v227 = vpack.c.b16 %v220, %v219
    %v228 = vpack.c.b16 %v222, %v221
    %v229 = vpack.c.b16 %v224, %v223
    %v230 = vpack.c.b16 %v226, %v225
    %vm231 = vcmask 523264
    %v233 = vsel %vm231, %v227, 0
    %v236 = vsel %vm231, %v228, 0
    %v239 = vsel %vm231, %v229, 0
    %v242 = vsel %vm231, %v230, 0
    %244 = vmatprep.subr.bf16.mxu0 0
    %245 = vmatpush1.bf16.msra.mxu0 %v207
    %246 = vmatprep.subr.bf16.mxu0 0
    %247 = vmatpush1.bf16.msra.mxu0 %v208
    %248 = vmatprep.subr.bf16.mxu0 0
    %249 = vmatpush1.bf16.msra.mxu0 %v209
    %250 = vmatprep.subr.bf16.mxu0 0
    %251 = vmatpush1.bf16.msra.mxu0 %v210
    %252 = vmatprep.subr.bf16.mxu0 0
    %253 = vmatpush1.bf16.msra.mxu0 0
    %254 = vmatprep.subr.bf16.mxu0 0
    %255 = vmatpush1.bf16.msra.mxu0 0
    %256 = vmatprep.subr.bf16.mxu0 0
    %257 = vmatpush1.bf16.msra.mxu0 0
    %258 = vmatprep.subr.bf16.mxu0 0
    %259 = vmatpush1.bf16.msra.mxu0 0
    %260 = vmatprep.subr.bf16.mxu0 0
    %261 = vmatpush1.bf16.msra.mxu0 0
    %262 = vmatprep.subr.bf16.mxu0 0
    %263 = vmatpush1.bf16.msra.mxu0 0
    %264 = vmatprep.subr.bf16.mxu0 0
    %265 = vmatpush1.bf16.msra.mxu0 0
    %266 = vmatprep.subr.bf16.mxu0 0
    %267 = vmatpush1.bf16.msra.mxu0 0
    %268 = vmatprep.subr.bf16.mxu0 0
    %269 = vmatpush1.bf16.msra.mxu0 0
    %270 = vmatprep.subr.bf16.mxu0 0
    %271 = vmatpush1.bf16.msra.mxu0 0
    %272 = vmatprep.subr.bf16.mxu0 0
    %273 = vmatpush1.bf16.msra.mxu0 0
    %274 = vmatprep.subr.bf16.mxu0 0
    %275 = vmatpush1.bf16.msra.mxu0 0
    %276 = vmatprep.mubr.bf16.mxu0 0
    %277 = vmatmul.mubr.bf16.gmra.mrb[0].mxu0 %v233
    %v278 = vpop.f32.mrb[0].mxu0
    %v279 = vadd.f32 %v199, %v278
    %v280 = vpop.f32.mrb[0].mxu0
    %v281 = vpop.f32.mrb[0].mxu0
    %v282 = vadd.f32 %v200, %v281
    %v283 = vpop.f32.mrb[0].mxu0
    %284 = vmatprep.mubr.bf16.mxu0 0
    %285 = vmatmul.mubr.bf16.gmra.mrb[0].mxu0 %v236
    %v286 = vpop.f32.mrb[0].mxu0
    %v287 = vadd.f32 %v201, %v286
    %v288 = vpop.f32.mrb[0].mxu0
    %v289 = vpop.f32.mrb[0].mxu0
    %v290 = vadd.f32 %v202, %v289
    %v291 = vpop.f32.mrb[0].mxu0
    %292 = vmatprep.mubr.bf16.mxu0 0
    %293 = vmatmul.mubr.bf16.gmra.mrb[0].mxu0 %v239
    %v294 = vpop.f32.mrb[0].mxu0
    %v295 = vadd.f32 %v203, %v294
    %v296 = vpop.f32.mrb[0].mxu0
    %v297 = vpop.f32.mrb[0].mxu0
    %v298 = vadd.f32 %v204, %v297
    %v299 = vpop.f32.mrb[0].mxu0
    %300 = vmatprep.mubr.bf16.mxu0 0
    %301 = vmatmul.mubr.bf16.gmra.mrb[0].mxu0 %v242
    %v302 = vpop.f32.mrb[0].mxu0
    %v303 = vadd.f32 %v205, %v302
    %v304 = vpop.f32.mrb[0].mxu0
    %v305 = vpop.f32.mrb[0].mxu0
    %v306 = vadd.f32 %v206, %v305
    %v307 = vpop.f32.mrb[0].mxu0
    %308 = vdwg.mxu0
    %v309 = vmax.f32 %v279, 0.0
    %v310 = vmax.f32 %v282, 0.0
    %v311 = vmax.f32 %v287, 0.0
    %v312 = vmax.f32 %v290, 0.0
    %v313 = vmax.f32 %v295, 0.0
    %v314 = vmax.f32 %v298, 0.0
    %v315 = vmax.f32 %v303, 0.0
    %v316 = vmax.f32 %v306, 0.0
    %v317 = vpack.c.bf16 %v310, %v309
    %v318 = vpack.c.bf16 %v312, %v311
    %v319 = vpack.c.bf16 %v314, %v313
    %v320 = vpack.c.bf16 %v316, %v315
    %v321 = vld [vmem:[#allocation4] sm:$0xf]
    %v322 = vld [vmem:[#allocation4 + $0x4] sm:$0xf]
    %v323 = vld [vmem:[#allocation4 + $0x8] sm:$0xf]
    %v324 = vld [vmem:[#allocation4 + $0xc] sm:$0xf]
    %v325 = vld [vmem:[#allocation4 + $0x10] sm:$0xf]
    %v326 = vld [vmem:[#allocation4 + $0x14] sm:$0xf]
    %v327 = vld [vmem:[#allocation4 + $0x18] sm:$0xf]
    %v328 = vld [vmem:[#allocation4 + $0x1c] sm:$0xf]
    %v329 = vld [vmem:[#allocation4 + $0x20] sm:$0xf]
    %v330 = vld [vmem:[#allocation4 + $0x24] sm:$0xf]
    %v331 = vld [vmem:[#allocation4 + $0x28] sm:$0xf]
    %v332 = vld [vmem:[#allocation4 + $0x2c] sm:$0xf]
    %v333 = vld [vmem:[#allocation4 + $0x30] sm:$0xf]
    %v334 = vld [vmem:[#allocation4 + $0x34] sm:$0xf]
    %v335 = vld [vmem:[#allocation4 + $0x38] sm:$0xf]
    %v336 = vld [vmem:[#allocation4 + $0x3c] sm:$0xf]
    %v353 = vunpack.c.l.b16 %v321
    %v354 = vunpack.c.l.b16 %v322
    %v355 = vunpack.c.l.b16 %v323
    %v356 = vunpack.c.l.b16 %v324
    %v357 = vunpack.c.l.b16 %v325
    %v358 = vunpack.c.l.b16 %v326
    %v359 = vunpack.c.l.b16 %v327
    %v360 = vunpack.c.l.b16 %v328
    %v361 = vunpack.c.l.b16 %v329
    %v362 = vunpack.c.l.b16 %v330
    %v363 = vunpack.c.l.b16 %v331
    %v364 = vunpack.c.l.b16 %v332
    %v365 = vunpack.c.l.b16 %v333
    %v366 = vunpack.c.l.b16 %v334
    %v367 = vunpack.c.l.b16 %v335
    %v368 = vunpack.c.l.b16 %v336
    %v369 = vpack.c.b16 %v354, %v353
    %v370 = vpack.c.b16 %v356, %v355
    %v371 = vpack.c.b16 %v358, %v357
    %v372 = vpack.c.b16 %v360, %v359
    %v373 = vpack.c.b16 %v362, %v361
    %v374 = vpack.c.b16 %v364, %v363
    %v375 = vpack.c.b16 %v366, %v365
    %v376 = vpack.c.b16 %v368, %v367
    %385 = vmatprep.subr.bf16.mxu0 0
    %386 = vmatpush1.bf16.msra.mxu0 %v369
    %387 = vmatprep.subr.bf16.mxu0 0
    %388 = vmatpush1.bf16.msra.mxu0 %v370
    %389 = vmatprep.subr.bf16.mxu0 0
    %390 = vmatpush1.bf16.msra.mxu0 %v371
    %391 = vmatprep.subr.bf16.mxu0 0
    %392 = vmatpush1.bf16.msra.mxu0 %v372
    %393 = vmatprep.subr.bf16.mxu0 0
    %394 = vmatpush1.bf16.msra.mxu0 %v373
    %395 = vmatprep.subr.bf16.mxu0 0
    %396 = vmatpush1.bf16.msra.mxu0 %v374
    %397 = vmatprep.subr.bf16.mxu0 0
    %398 = vmatpush1.bf16.msra.mxu0 %v375
    %399 = vmatprep.subr.bf16.mxu0 0
    %400 = vmatpush1.bf16.msra.mxu0 %v376
    %401 = vmatprep.subr.bf16.mxu0 0
    %402 = vmatpush1.bf16.msra.mxu0 0
    %403 = vmatprep.subr.bf16.mxu0 0
    %404 = vmatpush1.bf16.msra.mxu0 0
    %405 = vmatprep.subr.bf16.mxu0 0
    %406 = vmatpush1.bf16.msra.mxu0 0
    %407 = vmatprep.subr.bf16.mxu0 0
    %408 = vmatpush1.bf16.msra.mxu0 0
    %409 = vmatprep.subr.bf16.mxu0 0
    %410 = vmatpush1.bf16.msra.mxu0 0
    %411 = vmatprep.subr.bf16.mxu0 0
    %412 = vmatpush1.bf16.msra.mxu0 0
    %413 = vmatprep.subr.bf16.mxu0 0
    %414 = vmatpush1.bf16.msra.mxu0 0
    %415 = vmatprep.subr.bf16.mxu0 0
    %416 = vmatpush1.bf16.msra.mxu0 0
    %417 = vmatprep.mubr.bf16.mxu0 0
    %418 = vmatmul.mubr.bf16.gmra.mrb[0].mxu0 %v317
    %v419 = vpop.f32.mrb[0].mxu0
    %v420 = vadd.f32 0.0, %v419
    %v421 = vpop.f32.mrb[0].mxu0
    %v422 = vpop.f32.mrb[0].mxu0
    %v423 = vadd.f32 0.0, %v422
    %v424 = vpop.f32.mrb[0].mxu0
    %425 = vmatprep.mubr.bf16.mxu0 0
    %426 = vmatmul.mubr.bf16.gmra.mrb[0].mxu0 %v318
    %v427 = vpop.f32.mrb[0].mxu0
    %v428 = vadd.f32 0.0, %v427
    %v429 = vpop.f32.mrb[0].mxu0
    %v430 = vpop.f32.mrb[0].mxu0
    %v431 = vadd.f32 0.0, %v430
    %v432 = vpop.f32.mrb[0].mxu0
    %433 = vmatprep.mubr.bf16.mxu0 0
    %434 = vmatmul.mubr.bf16.gmra.mrb[0].mxu0 %v319
    %v435 = vpop.f32.mrb[0].mxu0
    %v436 = vadd.f32 0.0, %v435
    %v437 = vpop.f32.mrb[0].mxu0
    %v438 = vpop.f32.mrb[0].mxu0
    %v439 = vadd.f32 0.0, %v438
    %v440 = vpop.f32.mrb[0].mxu0
    %441 = vmatprep.mubr.bf16.mxu0 0
    %442 = vmatmul.mubr.bf16.gmra.mrb[0].mxu0 %v320
    %v443 = vpop.f32.mrb[0].mxu0
    %v444 = vadd.f32 0.0, %v443
    %v445 = vpop.f32.mrb[0].mxu0
    %v446 = vpop.f32.mrb[0].mxu0
    %v447 = vadd.f32 0.0, %v446
    %v448 = vpop.f32.mrb[0].mxu0
    %449 = vdwg.mxu0
    %v450 = vpack.c.bf16 %v423, %v420
    %v451 = vpack.c.bf16 %v431, %v428
    %v452 = vpack.c.bf16 %v439, %v436
    %v453 = vpack.c.bf16 %v447, %v444
    %454 = vmatprep.subr.bf16.mxu0 0
    %455 = vmatpush1.bf16.msra.mxu0 %v450
    %456 = vmatprep.subr.bf16.mxu0 0
    %457 = vmatpush1.bf16.msra.mxu0 %v451
    %458 = vmatprep.subr.bf16.mxu0 0
    %459 = vmatpush1.bf16.msra.mxu0 %v452
    %460 = vmatprep.subr.bf16.mxu0 0
    %461 = vmatpush1.bf16.msra.mxu0 %v453
    %462 = vmatprep.subr.bf16.mxu0 0
    %463 = vmatpush1.bf16.msra.mxu0 0
    %464 = vmatprep.subr.bf16.mxu0 0
    %465 = vmatpush1.bf16.msra.mxu0 0
    %466 = vmatprep.subr.bf16.mxu0 0
    %467 = vmatpush1.bf16.msra.mxu0 0
    %468 = vmatprep.subr.bf16.mxu0 0
    %469 = vmatpush1.bf16.msra.mxu0 0
    %470 = vmatprep.subr.bf16.mxu0 0
    %471 = vmatpush1.bf16.msra.mxu0 0
    %472 = vmatprep.subr.bf16.mxu0 0
    %473 = vmatpush1.bf16.msra.mxu0 0
    %474 = vmatprep.subr.bf16.mxu0 0
    %475 = vmatpush1.bf16.msra.mxu0 0
    %476 = vmatprep.subr.bf16.mxu0 0
    %477 = vmatpush1.bf16.msra.mxu0 0
    %478 = vmatprep.subr.bf16.mxu0 0
    %479 = vmatpush1.bf16.msra.mxu0 0
    %480 = vmatprep.subr.bf16.mxu0 0
    %481 = vmatpush1.bf16.msra.mxu0 0
    %482 = vmatprep.subr.bf16.mxu0 0
    %483 = vmatpush1.bf16.msra.mxu0 0
    %484 = vmatprep.subr.bf16.mxu0 0
    %485 = vmatpush1.bf16.msra.mxu0 0
    %486 = vmatprep.mubr.bf16.mxu0 0
    %487 = vmatmul.mubr.bf16.gmra.mrb[0].mxu0 %v233
    %v488 = vpop.f32.mrb[0].mxu0
    %v489 = vadd.f32 %v199, %v488
    %v490 = vpop.f32.mrb[0].mxu0
    %v491 = vpop.f32.mrb[0].mxu0
    %v492 = vadd.f32 %v200, %v491
    %v493 = vpop.f32.mrb[0].mxu0
    %494 = vmatprep.mubr.bf16.mxu0 0
    %495 = vmatmul.mubr.bf16.gmra.mrb[0].mxu0 %v236
    %v496 = vpop.f32.mrb[0].mxu0
    %v497 = vadd.f32 %v201, %v496
    %v498 = vpop.f32.mrb[0].mxu0
    %v499 = vpop.f32.mrb[0].mxu0
    %v500 = vadd.f32 %v202, %v499
    %v501 = vpop.f32.mrb[0].mxu0
    %502 = vmatprep.mubr.bf16.mxu0 0
    %503 = vmatmul.mubr.bf16.gmra.mrb[0].mxu0 %v239
    %v504 = vpop.f32.mrb[0].mxu0
    %v505 = vadd.f32 %v203, %v504
    %v506 = vpop.f32.mrb[0].mxu0
    %v507 = vpop.f32.mrb[0].mxu0
    %v508 = vadd.f32 %v204, %v507
    %v509 = vpop.f32.mrb[0].mxu0
    %510 = vmatprep.mubr.bf16.mxu0 0
    %511 = vmatmul.mubr.bf16.gmra.mrb[0].mxu0 %v242
    %v512 = vpop.f32.mrb[0].mxu0
    %v513 = vadd.f32 %v205, %v512
    %v514 = vpop.f32.mrb[0].mxu0
    %v515 = vpop.f32.mrb[0].mxu0
    %v516 = vadd.f32 %v206, %v515
    %v517 = vpop.f32.mrb[0].mxu0
    %518 = vdwg.mxu0
    %v519 = vmax.f32 %v489, 0.0
    %v520 = vmax.f32 %v492, 0.0
    %v521 = vmax.f32 %v497, 0.0
    %v522 = vmax.f32 %v500, 0.0
    %v523 = vmax.f32 %v505, 0.0
    %v524 = vmax.f32 %v508, 0.0
    %v525 = vmax.f32 %v513, 0.0
    %v526 = vmax.f32 %v516, 0.0
    %v527 = vpack.c.bf16 %v520, %v519
    %v528 = vpack.c.bf16 %v522, %v521
    %v529 = vpack.c.bf16 %v524, %v523
    %v530 = vpack.c.bf16 %v526, %v525
    %v531 = vld [vmem:[%s5] sm:$0xff]
    %v532 = vld [vmem:[%s5 + $0x8] sm:$0xff]
    %v533 = vld [vmem:[%s5 + $0x10] sm:$0xff]
    %v534 = vld [vmem:[%s5 + $0x18] sm:$0xff]
    %v535 = vld [vmem:[%s5 + $0x20] sm:$0xff]
    %v536 = vld [vmem:[%s5 + $0x28] sm:$0xff]
    %v537 = vld [vmem:[%s5 + $0x30] sm:$0xff]
    %v538 = vld [vmem:[%s5 + $0x38] sm:$0xff]
    %v539 = vld [vmem:[%s5 + $0x40] sm:$0xff]
    %v540 = vld [vmem:[%s5 + $0x48] sm:$0xff]
    %v541 = vld [vmem:[%s5 + $0x50] sm:$0xff]
    %v542 = vld [vmem:[%s5 + $0x58] sm:$0xff]
    %v543 = vld [vmem:[%s5 + $0x60] sm:$0xff]
    %v544 = vld [vmem:[%s5 + $0x68] sm:$0xff]
    %v545 = vld [vmem:[%s5 + $0x70] sm:$0xff]
    %v546 = vld [vmem:[%s5 + $0x78] sm:$0xff]
    %v563 = vunpack.c.l.b16 %v531
    %v564 = vunpack.c.h.b16 %v531
    %v565 = vunpack.c.l.b16 %v532
    %v566 = vunpack.c.h.b16 %v532
    %v567 = vunpack.c.l.b16 %v533
    %v568 = vunpack.c.h.b16 %v533
    %v569 = vunpack.c.l.b16 %v534
    %v570 = vunpack.c.h.b16 %v534
    %v571 = vunpack.c.l.b16 %v535
    %v572 = vunpack.c.h.b16 %v535
    %v573 = vunpack.c.l.b16 %v536
    %v574 = vunpack.c.h.b16 %v536
    %v575 = vunpack.c.l.b16 %v537
    %v576 = vunpack.c.h.b16 %v537
    %v577 = vunpack.c.l.b16 %v538
    %v578 = vunpack.c.h.b16 %v538
    %v579 = vunpack.c.l.b16 %v539
    %v580 = vunpack.c.h.b16 %v539
    %v581 = vunpack.c.l.b16 %v540
    %v582 = vunpack.c.h.b16 %v540
    %v583 = vunpack.c.l.b16 %v541
    %v584 = vunpack.c.h.b16 %v541
    %v585 = vunpack.c.l.b16 %v542
    %v586 = vunpack.c.h.b16 %v542
    %v587 = vunpack.c.l.b16 %v543
    %v588 = vunpack.c.h.b16 %v543
    %v589 = vunpack.c.l.b16 %v544
    %v590 = vunpack.c.h.b16 %v544
    %v591 = vunpack.c.l.b16 %v545
    %v592 = vunpack.c.h.b16 %v545
    %v593 = vunpack.c.l.b16 %v546
    %v594 = vunpack.c.h.b16 %v546
    %v595 = vpack.c.b16 %v565, %v563
    %v596 = vpack.c.b16 %v566, %v564
    %v597 = vpack.c.b16 %v569, %v567
    %v598 = vpack.c.b16 %v570, %v568
    %v599 = vpack.c.b16 %v573, %v571
    %v600 = vpack.c.b16 %v574, %v572
    %v601 = vpack.c.b16 %v577, %v575
    %v602 = vpack.c.b16 %v578, %v576
    %v603 = vpack.c.b16 %v581, %v579
    %v604 = vpack.c.b16 %v582, %v580
    %v605 = vpack.c.b16 %v585, %v583
    %v606 = vpack.c.b16 %v586, %v584
    %v607 = vpack.c.b16 %v589, %v587
    %v608 = vpack.c.b16 %v590, %v588
    %v609 = vpack.c.b16 %v593, %v591
    %v610 = vpack.c.b16 %v594, %v592
    %627 = vmatprep.subr.bf16.mxu0 %v596
    %628 = vmatpush1.bf16.msra.mxu0 %v595
    %629 = vmatprep.subr.bf16.mxu0 %v598
    %630 = vmatpush1.bf16.msra.mxu0 %v597
    %631 = vmatprep.subr.bf16.mxu0 %v600
    %632 = vmatpush1.bf16.msra.mxu0 %v599
    %633 = vmatprep.subr.bf16.mxu0 %v602
    %634 = vmatpush1.bf16.msra.mxu0 %v601
    %635 = vmatprep.subr.bf16.mxu0 %v604
    %636 = vmatpush1.bf16.msra.mxu0 %v603
    %637 = vmatprep.subr.bf16.mxu0 %v606
    %638 = vmatpush1.bf16.msra.mxu0 %v605
    %639 = vmatprep.subr.bf16.mxu0 %v608
    %640 = vmatpush1.bf16.msra.mxu0 %v607
    %641 = vmatprep.subr.bf16.mxu0 %v610
    %642 = vmatpush1.bf16.msra.mxu0 %v609
    %643 = vmatprep.subr.bf16.mxu0 0
    %644 = vmatpush1.bf16.msra.mxu0 0
    %645 = vmatprep.subr.bf16.mxu0 0
    %646 = vmatpush1.bf16.msra.mxu0 0
    %647 = vmatprep.subr.bf16.mxu0 0
    %648 = vmatpush1.bf16.msra.mxu0 0
    %649 = vmatprep.subr.bf16.mxu0 0
    %650 = vmatpush1.bf16.msra.mxu0 0
    %651 = vmatprep.subr.bf16.mxu0 0
    %652 = vmatpush1.bf16.msra.mxu0 0
    %653 = vmatprep.subr.bf16.mxu0 0
    %654 = vmatpush1.bf16.msra.mxu0 0
    %655 = vmatprep.subr.bf16.mxu0 0
    %656 = vmatpush1.bf16.msra.mxu0 0
    %657 = vmatprep.subr.bf16.mxu0 0
    %658 = vmatpush1.bf16.msra.mxu0 0
    %659 = vmatprep.mubr.bf16.mxu0 0
    %660 = vmatmul.mubr.bf16.gmra.mrb[0].mxu0 %v527
    %v661 = vpop.f32.mrb[0].mxu0
    %v662 = vadd.f32 0.0, %v661
    %v663 = vpop.f32.mrb[0].mxu0
    %v664 = vadd.f32 0.0, %v663
    %v665 = vpop.f32.mrb[0].mxu0
    %v666 = vadd.f32 0.0, %v665
    %v667 = vpop.f32.mrb[0].mxu0
    %v668 = vadd.f32 0.0, %v667
    %669 = vmatprep.mubr.bf16.mxu0 0
    %670 = vmatmul.mubr.bf16.gmra.mrb[0].mxu0 %v528
    %v671 = vpop.f32.mrb[0].mxu0
    %v672 = vadd.f32 0.0, %v671
    %v673 = vpop.f32.mrb[0].mxu0
    %v674 = vadd.f32 0.0, %v673
    %v675 = vpop.f32.mrb[0].mxu0
    %v676 = vadd.f32 0.0, %v675
    %v677 = vpop.f32.mrb[0].mxu0
    %v678 = vadd.f32 0.0, %v677
    %679 = vmatprep.mubr.bf16.mxu0 0
    %680 = vmatmul.mubr.bf16.gmra.mrb[0].mxu0 %v529
    %v681 = vpop.f32.mrb[0].mxu0
    %v682 = vadd.f32 0.0, %v681
    %v683 = vpop.f32.mrb[0].mxu0
    %v684 = vadd.f32 0.0, %v683
    %v685 = vpop.f32.mrb[0].mxu0
    %v686 = vadd.f32 0.0, %v685
    %v687 = vpop.f32.mrb[0].mxu0
    %v688 = vadd.f32 0.0, %v687
    %689 = vmatprep.mubr.bf16.mxu0 0
    %690 = vmatmul.mubr.bf16.gmra.mrb[0].mxu0 %v530
    %v691 = vpop.f32.mrb[0].mxu0
    %v692 = vadd.f32 0.0, %v691
    %v693 = vpop.f32.mrb[0].mxu0
    %v694 = vadd.f32 0.0, %v693
    %v695 = vpop.f32.mrb[0].mxu0
    %v696 = vadd.f32 0.0, %v695
    %v697 = vpop.f32.mrb[0].mxu0
    %v698 = vadd.f32 0.0, %v697
    %699 = vdwg.mxu0
    %v700 = vld [vmem:[%s7] sm:$0x1]
    %v702 = vlaneseq
    %v703 = vshrl.u32 %v702, 7
    %v704 = vsub.s32 0, %v703
    %v705 = vrot.slane %v700, %v704
    %v707 = vadd.f32 %v664, %v705
    %v708 = vadd.f32 %v668, %v705
    %v709 = vadd.f32 %v674, %v705
    %v710 = vadd.f32 %v678, %v705
    %v711 = vadd.f32 %v684, %v705
    %v712 = vadd.f32 %v688, %v705
    %v713 = vadd.f32 %v694, %v705
    %v714 = vadd.f32 %v698, %v705
    %v715 = vpack.c.bf16 %v666, %v662
    %v716 = vpack.c.bf16 %v676, %v672
    %v717 = vpack.c.bf16 %v686, %v682
    %v718 = vpack.c.bf16 %v696, %v692
    %719 = vmatprep.subr.bf16.mxu0 0
    %720 = vmatpush1.bf16.msra.mxu0 %v715
    %721 = vmatprep.subr.bf16.mxu0 0
    %722 = vmatpush1.bf16.msra.mxu0 %v716
    %723 = vmatprep.subr.bf16.mxu0 0
    %724 = vmatpush1.bf16.msra.mxu0 %v717
    %725 = vmatprep.subr.bf16.mxu0 0
    %726 = vmatpush1.bf16.msra.mxu0 %v718
    %727 = vmatprep.subr.bf16.mxu0 0
    %728 = vmatpush1.bf16.msra.mxu0 0
    %729 = vmatprep.subr.bf16.mxu0 0
    %730 = vmatpush1.bf16.msra.mxu0 0
    %731 = vmatprep.subr.bf16.mxu0 0
    %732 = vmatpush1.bf16.msra.mxu0 0
    %733 = vmatprep.subr.bf16.mxu0 0
    %734 = vmatpush1.bf16.msra.mxu0 0
    %735 = vmatprep.subr.bf16.mxu0 0
    %736 = vmatpush1.bf16.msra.mxu0 0
    %737 = vmatprep.subr.bf16.mxu0 0
    %738 = vmatpush1.bf16.msra.mxu0 0
    %739 = vmatprep.subr.bf16.mxu0 0
    %740 = vmatpush1.bf16.msra.mxu0 0
    %741 = vmatprep.subr.bf16.mxu0 0
    %742 = vmatpush1.bf16.msra.mxu0 0
    %743 = vmatprep.subr.bf16.mxu0 0
    %744 = vmatpush1.bf16.msra.mxu0 0
    %745 = vmatprep.subr.bf16.mxu0 0
    %746 = vmatpush1.bf16.msra.mxu0 0
    %747 = vmatprep.subr.bf16.mxu0 0
    %748 = vmatpush1.bf16.msra.mxu0 0
    %749 = vmatprep.subr.bf16.mxu0 0
    %750 = vmatpush1.bf16.msra.mxu0 0
    %751 = vmatprep.mubr.bf16.mxu0 0
    %752 = vmatmul.mubr.bf16.gmra.mrb[0].mxu0 %v233
    %v753 = vpop.f32.mrb[0].mxu0
    %v754 = vadd.f32 %v707, %v753
    %v755 = vpop.f32.mrb[0].mxu0
    %v756 = vpop.f32.mrb[0].mxu0
    %v757 = vadd.f32 %v708, %v756
    %v758 = vpop.f32.mrb[0].mxu0
    %759 = vmatprep.mubr.bf16.mxu0 0
    %760 = vmatmul.mubr.bf16.gmra.mrb[0].mxu0 %v236
    %v761 = vpop.f32.mrb[0].mxu0
    %v762 = vadd.f32 %v709, %v761
    %v763 = vpop.f32.mrb[0].mxu0
    %v764 = vpop.f32.mrb[0].mxu0
    %v765 = vadd.f32 %v710, %v764
    %v766 = vpop.f32.mrb[0].mxu0
    %767 = vmatprep.mubr.bf16.mxu0 0
    %768 = vmatmul.mubr.bf16.gmra.mrb[0].mxu0 %v239
    %v769 = vpop.f32.mrb[0].mxu0
    %v770 = vadd.f32 %v711, %v769
    %v771 = vpop.f32.mrb[0].mxu0
    %v772 = vpop.f32.mrb[0].mxu0
    %v773 = vadd.f32 %v712, %v772
    %v774 = vpop.f32.mrb[0].mxu0
    %775 = vmatprep.mubr.bf16.mxu0 0
    %776 = vmatmul.mubr.bf16.gmra.mrb[0].mxu0 %v242
    %v777 = vpop.f32.mrb[0].mxu0
    %v778 = vadd.f32 %v713, %v777
    %v779 = vpop.f32.mrb[0].mxu0
    %v780 = vpop.f32.mrb[0].mxu0
    %v781 = vadd.f32 %v714, %v780
    %v782 = vpop.f32.mrb[0].mxu0
    %783 = vdwg.mxu0
    %v784 = vpack.c.bf16 %v757, %v754
    %v785 = vpack.c.bf16 %v765, %v762
    %v786 = vpack.c.bf16 %v773, %v770
    %v787 = vpack.c.bf16 %v781, %v778
    %v788 = vld [vmem:[#allocation6] sm:$0xf]
    %v789 = vld [vmem:[#allocation6 + $0x4] sm:$0xf]
    %v790 = vld [vmem:[#allocation6 + $0x8] sm:$0xf]
    %v791 = vld [vmem:[#allocation6 + $0xc] sm:$0xf]
    %v792 = vld [vmem:[#allocation6 + $0x10] sm:$0xf]
    %v793 = vld [vmem:[#allocation6 + $0x14] sm:$0xf]
    %v794 = vld [vmem:[#allocation6 + $0x18] sm:$0xf]
    %v795 = vld [vmem:[#allocation6 + $0x1c] sm:$0xf]
    %v796 = vld [vmem:[#allocation6 + $0x20] sm:$0xf]
    %v797 = vld [vmem:[#allocation6 + $0x24] sm:$0xf]
    %v798 = vld [vmem:[#allocation6 + $0x28] sm:$0xf]
    %v799 = vld [vmem:[#allocation6 + $0x2c] sm:$0xf]
    %v800 = vld [vmem:[#allocation6 + $0x30] sm:$0xf]
    %v801 = vld [vmem:[#allocation6 + $0x34] sm:$0xf]
    %v802 = vld [vmem:[#allocation6 + $0x38] sm:$0xf]
    %v803 = vld [vmem:[#allocation6 + $0x3c] sm:$0xf]
    %v820 = vunpack.c.l.b16 %v788
    %v821 = vunpack.c.l.b16 %v789
    %v822 = vunpack.c.l.b16 %v790
    %v823 = vunpack.c.l.b16 %v791
    %v824 = vunpack.c.l.b16 %v792
    %v825 = vunpack.c.l.b16 %v793
    %v826 = vunpack.c.l.b16 %v794
    %v827 = vunpack.c.l.b16 %v795
    %v828 = vunpack.c.l.b16 %v796
    %v829 = vunpack.c.l.b16 %v797
    %v830 = vunpack.c.l.b16 %v798
    %v831 = vunpack.c.l.b16 %v799
    %v832 = vunpack.c.l.b16 %v800
    %v833 = vunpack.c.l.b16 %v801
    %v834 = vunpack.c.l.b16 %v802
    %v835 = vunpack.c.l.b16 %v803
    %v836 = vpack.c.b16 %v821, %v820
    %v837 = vpack.c.b16 %v823, %v822
    %v838 = vpack.c.b16 %v825, %v824
    %v839 = vpack.c.b16 %v827, %v826
    %v840 = vpack.c.b16 %v829, %v828
    %v841 = vpack.c.b16 %v831, %v830
    %v842 = vpack.c.b16 %v833, %v832
    %v843 = vpack.c.b16 %v835, %v834
    %852 = vmatprep.subr.bf16.mxu0 0
    %853 = vmatpush1.bf16.msra.mxu0 %v836
    %854 = vmatprep.subr.bf16.mxu0 0
    %855 = vmatpush1.bf16.msra.mxu0 %v837
    %856 = vmatprep.subr.bf16.mxu0 0
    %857 = vmatpush1.bf16.msra.mxu0 %v838
    %858 = vmatprep.subr.bf16.mxu0 0
    %859 = vmatpush1.bf16.msra.mxu0 %v839
    %860 = vmatprep.subr.bf16.mxu0 0
    %861 = vmatpush1.bf16.msra.mxu0 %v840
    %862 = vmatprep.subr.bf16.mxu0 0
    %863 = vmatpush1.bf16.msra.mxu0 %v841
    %864 = vmatprep.subr.bf16.mxu0 0
    %865 = vmatpush1.bf16.msra.mxu0 %v842
    %866 = vmatprep.subr.bf16.mxu0 0
    %867 = vmatpush1.bf16.msra.mxu0 %v843
    %868 = vmatprep.subr.bf16.mxu0 0
    %869 = vmatpush1.bf16.msra.mxu0 0
    %870 = vmatprep.subr.bf16.mxu0 0
    %871 = vmatpush1.bf16.msra.mxu0 0
    %872 = vmatprep.subr.bf16.mxu0 0
    %873 = vmatpush1.bf16.msra.mxu0 0
    %874 = vmatprep.subr.bf16.mxu0 0
    %875 = vmatpush1.bf16.msra.mxu0 0
    %876 = vmatprep.subr.bf16.mxu0 0
    %877 = vmatpush1.bf16.msra.mxu0 0
    %878 = vmatprep.subr.bf16.mxu0 0
    %879 = vmatpush1.bf16.msra.mxu0 0
    %880 = vmatprep.subr.bf16.mxu0 0
    %881 = vmatpush1.bf16.msra.mxu0 0
    %882 = vmatprep.subr.bf16.mxu0 0
    %883 = vmatpush1.bf16.msra.mxu0 0
    %884 = vmatprep.mubr.bf16.mxu0 0
    %885 = vmatmul.mubr.bf16.gmra.mrb[0].mxu0 %v784
    %v886 = vpop.f32.mrb[0].mxu0
    %v887 = vadd.f32 0.0, %v886
    %v888 = vpop.f32.mrb[0].mxu0
    %v889 = vpop.f32.mrb[0].mxu0
    %v890 = vadd.f32 0.0, %v889
    %v891 = vpop.f32.mrb[0].mxu0
    %892 = vmatprep.mubr.bf16.mxu0 0
    %893 = vmatmul.mubr.bf16.gmra.mrb[0].mxu0 %v785
    %v894 = vpop.f32.mrb[0].mxu0
    %v895 = vadd.f32 0.0, %v894
    %v896 = vpop.f32.mrb[0].mxu0
    %v897 = vpop.f32.mrb[0].mxu0
    %v898 = vadd.f32 0.0, %v897
    %v899 = vpop.f32.mrb[0].mxu0
    %900 = vmatprep.mubr.bf16.mxu0 0
    %901 = vmatmul.mubr.bf16.gmra.mrb[0].mxu0 %v786
    %v902 = vpop.f32.mrb[0].mxu0
    %v903 = vadd.f32 0.0, %v902
    %v904 = vpop.f32.mrb[0].mxu0
    %v905 = vpop.f32.mrb[0].mxu0
    %v906 = vadd.f32 0.0, %v905
    %v907 = vpop.f32.mrb[0].mxu0
    %908 = vmatprep.mubr.bf16.mxu0 0
    %909 = vmatmul.mubr.bf16.gmra.mrb[0].mxu0 %v787
    %v910 = vpop.f32.mrb[0].mxu0
    %v911 = vadd.f32 0.0, %v910
    %v912 = vpop.f32.mrb[0].mxu0
    %v913 = vpop.f32.mrb[0].mxu0
    %v914 = vadd.f32 0.0, %v913
    %v915 = vpop.f32.mrb[0].mxu0
    %916 = vdwg.mxu0
    %v917 = vpack.c.bf16 %v890, %v887
    %v918 = vpack.c.bf16 %v898, %v895
    %v919 = vpack.c.bf16 %v906, %v903
    %v920 = vpack.c.bf16 %v914, %v911
    %921 = vmatprep.subr.bf16.mxu0 0
    %922 = vmatpush1.bf16.msra.mxu0 %v917
    %923 = vmatprep.subr.bf16.mxu0 0
    %924 = vmatpush1.bf16.msra.mxu0 %v918
    %925 = vmatprep.subr.bf16.mxu0 0
    %926 = vmatpush1.bf16.msra.mxu0 %v919
    %927 = vmatprep.subr.bf16.mxu0 0
    %928 = vmatpush1.bf16.msra.mxu0 %v920
    %929 = vmatprep.subr.bf16.mxu0 0
    %930 = vmatpush1.bf16.msra.mxu0 0
    %931 = vmatprep.subr.bf16.mxu0 0
    %932 = vmatpush1.bf16.msra.mxu0 0
    %933 = vmatprep.subr.bf16.mxu0 0
    %934 = vmatpush1.bf16.msra.mxu0 0
    %935 = vmatprep.subr.bf16.mxu0 0
    %936 = vmatpush1.bf16.msra.mxu0 0
    %937 = vmatprep.subr.bf16.mxu0 0
    %938 = vmatpush1.bf16.msra.mxu0 0
    %939 = vmatprep.subr.bf16.mxu0 0
    %940 = vmatpush1.bf16.msra.mxu0 0
    %941 = vmatprep.subr.bf16.mxu0 0
    %942 = vmatpush1.bf16.msra.mxu0 0
    %943 = vmatprep.subr.bf16.mxu0 0
    %944 = vmatpush1.bf16.msra.mxu0 0
    %945 = vmatprep.subr.bf16.mxu0 0
    %946 = vmatpush1.bf16.msra.mxu0 0
    %947 = vmatprep.subr.bf16.mxu0 0
    %948 = vmatpush1.bf16.msra.mxu0 0
    %949 = vmatprep.subr.bf16.mxu0 0
    %950 = vmatpush1.bf16.msra.mxu0 0
    %951 = vmatprep.subr.bf16.mxu0 0
    %952 = vmatpush1.bf16.msra.mxu0 0
    %953 = vmatprep.mubr.bf16.mxu0 0
    %954 = vmatmul.mubr.bf16.gmra.mrb[0].mxu0 %v233
    %v955 = vpop.f32.mrb[0].mxu0
    %v956 = vadd.f32 %v707, %v955
    %v957 = vpop.f32.mrb[0].mxu0
    %v958 = vpop.f32.mrb[0].mxu0
    %v959 = vadd.f32 %v708, %v958
    %v960 = vpop.f32.mrb[0].mxu0
    %961 = vmatprep.mubr.bf16.mxu0 0
    %962 = vmatmul.mubr.bf16.gmra.mrb[0].mxu0 %v236
    %v963 = vpop.f32.mrb[0].mxu0
    %v964 = vadd.f32 %v709, %v963
    %v965 = vpop.f32.mrb[0].mxu0
    %v966 = vpop.f32.mrb[0].mxu0
    %v967 = vadd.f32 %v710, %v966
    %v968 = vpop.f32.mrb[0].mxu0
    %969 = vmatprep.mubr.bf16.mxu0 0
    %970 = vmatmul.mubr.bf16.gmra.mrb[0].mxu0 %v239
    %v971 = vpop.f32.mrb[0].mxu0
    %v972 = vadd.f32 %v711, %v971
    %v973 = vpop.f32.mrb[0].mxu0
    %v974 = vpop.f32.mrb[0].mxu0
    %v975 = vadd.f32 %v712, %v974
    %v976 = vpop.f32.mrb[0].mxu0
    %977 = vmatprep.mubr.bf16.mxu0 0
    %978 = vmatmul.mubr.bf16.gmra.mrb[0].mxu0 %v242
    %v979 = vpop.f32.mrb[0].mxu0
    %v980 = vadd.f32 %v713, %v979
    %v981 = vpop.f32.mrb[0].mxu0
    %v982 = vpop.f32.mrb[0].mxu0
    %v983 = vadd.f32 %v714, %v982
    %v984 = vpop.f32.mrb[0].mxu0
    %985 = vdwg.mxu0
    %v986 = vpack.c.bf16 %v959, %v956
    %v987 = vpack.c.bf16 %v967, %v964
    %v988 = vpack.c.bf16 %v975, %v972
    %v989 = vpack.c.bf16 %v983, %v980
    %v990 = vld [vmem:[%s8] sm:$0xf]
    %v991 = vld [vmem:[%s8 + $0x4] sm:$0xf]
    %v992 = vld [vmem:[%s8 + $0x8] sm:$0xf]
    %v993 = vld [vmem:[%s8 + $0xc] sm:$0xf]
    %v994 = vld [vmem:[%s8 + $0x10] sm:$0xf]
    %v995 = vld [vmem:[%s8 + $0x14] sm:$0xf]
    %v996 = vld [vmem:[%s8 + $0x18] sm:$0xf]
    %v997 = vld [vmem:[%s8 + $0x1c] sm:$0xf]
    %v998 = vld [vmem:[%s8 + $0x20] sm:$0xf]
    %v999 = vld [vmem:[%s8 + $0x24] sm:$0xf]
    %v1000 = vld [vmem:[%s8 + $0x28] sm:$0xf]
    %v1001 = vld [vmem:[%s8 + $0x2c] sm:$0xf]
    %v1002 = vld [vmem:[%s8 + $0x30] sm:$0xf]
    %v1003 = vld [vmem:[%s8 + $0x34] sm:$0xf]
    %v1004 = vld [vmem:[%s8 + $0x38] sm:$0xf]
    %v1005 = vld [vmem:[%s8 + $0x3c] sm:$0xf]
    %v1022 = vunpack.c.l.b16 %v990
    %v1023 = vunpack.c.l.b16 %v991
    %v1024 = vunpack.c.l.b16 %v992
    %v1025 = vunpack.c.l.b16 %v993
    %v1026 = vunpack.c.l.b16 %v994
    %v1027 = vunpack.c.l.b16 %v995
    %v1028 = vunpack.c.l.b16 %v996
    %v1029 = vunpack.c.l.b16 %v997
    %v1030 = vunpack.c.l.b16 %v998
    %v1031 = vunpack.c.l.b16 %v999
    %v1032 = vunpack.c.l.b16 %v1000
    %v1033 = vunpack.c.l.b16 %v1001
    %v1034 = vunpack.c.l.b16 %v1002
    %v1035 = vunpack.c.l.b16 %v1003
    %v1036 = vunpack.c.l.b16 %v1004
    %v1037 = vunpack.c.l.b16 %v1005
    %v1038 = vpack.c.b16 %v1023, %v1022
    %v1039 = vpack.c.b16 %v1025, %v1024
    %v1040 = vpack.c.b16 %v1027, %v1026
    %v1041 = vpack.c.b16 %v1029, %v1028
    %v1042 = vpack.c.b16 %v1031, %v1030
    %v1043 = vpack.c.b16 %v1033, %v1032
    %v1044 = vpack.c.b16 %v1035, %v1034
    %v1045 = vpack.c.b16 %v1037, %v1036
    %1054 = vmatprep.subr.bf16.mxu0 0
    %1055 = vmatpush1.bf16.msra.mxu0 %v1038
    %1056 = vmatprep.subr.bf16.mxu0 0
    %1057 = vmatpush1.bf16.msra.mxu0 %v1039
    %1058 = vmatprep.subr.bf16.mxu0 0
    %1059 = vmatpush1.bf16.msra.mxu0 %v1040
    %1060 = vmatprep.subr.bf16.mxu0 0
    %1061 = vmatpush1.bf16.msra.mxu0 %v1041
    %1062 = vmatprep.subr.bf16.mxu0 0
    %1063 = vmatpush1.bf16.msra.mxu0 %v1042
    %1064 = vmatprep.subr.bf16.mxu0 0
    %1065 = vmatpush1.bf16.msra.mxu0 %v1043
    %1066 = vmatprep.subr.bf16.mxu0 0
    %1067 = vmatpush1.bf16.msra.mxu0 %v1044
    %1068 = vmatprep.subr.bf16.mxu0 0
    %1069 = vmatpush1.bf16.msra.mxu0 %v1045
    %1070 = vmatprep.subr.bf16.mxu0 0
    %1071 = vmatpush1.bf16.msra.mxu0 0
    %1072 = vmatprep.subr.bf16.mxu0 0
    %1073 = vmatpush1.bf16.msra.mxu0 0
    %1074 = vmatprep.subr.bf16.mxu0 0
    %1075 = vmatpush1.bf16.msra.mxu0 0
    %1076 = vmatprep.subr.bf16.mxu0 0
    %1077 = vmatpush1.bf16.msra.mxu0 0
    %1078 = vmatprep.subr.bf16.mxu0 0
    %1079 = vmatpush1.bf16.msra.mxu0 0
    %1080 = vmatprep.subr.bf16.mxu0 0
    %1081 = vmatpush1.bf16.msra.mxu0 0
    %1082 = vmatprep.subr.bf16.mxu0 0
    %1083 = vmatpush1.bf16.msra.mxu0 0
    %1084 = vmatprep.subr.bf16.mxu0 0
    %1085 = vmatpush1.bf16.msra.mxu0 0
    %1086 = vmatprep.mubr.bf16.mxu0 0
    %1087 = vmatmul.mubr.bf16.gmra.mrb[0].mxu0 %v986
    %v1088 = vpop.f32.mrb[0].mxu0
    %v1089 = vadd.f32 0.0, %v1088
    %v1090 = vpop.f32.mrb[0].mxu0
    %v1091 = vpop.f32.mrb[0].mxu0
    %v1092 = vadd.f32 0.0, %v1091
    %v1093 = vpop.f32.mrb[0].mxu0
    %1094 = vmatprep.mubr.bf16.mxu0 0
    %1095 = vmatmul.mubr.bf16.gmra.mrb[0].mxu0 %v987
    %v1096 = vpop.f32.mrb[0].mxu0
    %v1097 = vadd.f32 0.0, %v1096
    %v1098 = vpop.f32.mrb[0].mxu0
    %v1099 = vpop.f32.mrb[0].mxu0
    %v1100 = vadd.f32 0.0, %v1099
    %v1101 = vpop.f32.mrb[0].mxu0
    %1102 = vmatprep.mubr.bf16.mxu0 0
    %1103 = vmatmul.mubr.bf16.gmra.mrb[0].mxu0 %v988
    %v1104 = vpop.f32.mrb[0].mxu0
    %v1105 = vadd.f32 0.0, %v1104
    %v1106 = vpop.f32.mrb[0].mxu0
    %v1107 = vpop.f32.mrb[0].mxu0
    %v1108 = vadd.f32 0.0, %v1107
    %v1109 = vpop.f32.mrb[0].mxu0
    %1110 = vmatprep.mubr.bf16.mxu0 0
    %1111 = vmatmul.mubr.bf16.gmra.mrb[0].mxu0 %v989
    %v1112 = vpop.f32.mrb[0].mxu0
    %v1113 = vadd.f32 0.0, %v1112
    %v1114 = vpop.f32.mrb[0].mxu0
    %v1115 = vpop.f32.mrb[0].mxu0
    %v1116 = vadd.f32 0.0, %v1115
    %v1117 = vpop.f32.mrb[0].mxu0
    %1118 = vdwg.mxu0
    %vm1119 = vcmask 64512
    %v1120 = vsel %vm1119, %v1089, -inf
    %1121 = vmax.xlane.f32.xlu0 %v1120
    %v1122 = vpop.xlane.xlu0 %1121
    %v1123 = vsel %vm1119, %v1092, -inf
    %1124 = vmax.xlane.f32.xlu0 %v1123
    %v1125 = vpop.xlane.xlu0 %1124
    %v1126 = vsel %vm1119, %v1097, -inf
    %1127 = vmax.xlane.f32.xlu0 %v1126
    %v1128 = vpop.xlane.xlu0 %1127
    %v1129 = vsel %vm1119, %v1100, -inf
    %1130 = vmax.xlane.f32.xlu0 %v1129
    %v1131 = vpop.xlane.xlu0 %1130
    %v1132 = vsel %vm1119, %v1105, -inf
    %1133 = vmax.xlane.f32.xlu0 %v1132
    %v1134 = vpop.xlane.xlu0 %1133
    %v1135 = vsel %vm1119, %v1108, -inf
    %1136 = vmax.xlane.f32.xlu0 %v1135
    %v1137 = vpop.xlane.xlu0 %1136
    %v1138 = vsel %vm1119, %v1113, -inf
    %1139 = vmax.xlane.f32.xlu0 %v1138
    %v1140 = vpop.xlane.xlu0 %1139
    %v1141 = vsel %vm1119, %v1116, -inf
    %1142 = vmax.xlane.f32.xlu0 %v1141
    %v1143 = vpop.xlane.xlu0 %1142
    %v1144 = vsub.f32 %v1089, %v1122
    %v1145 = vsub.f32 %v1092, %v1125
    %v1146 = vsub.f32 %v1097, %v1128
    %v1147 = vsub.f32 %v1100, %v1131
    %v1148 = vsub.f32 %v1105, %v1134
    %v1149 = vsub.f32 %v1108, %v1137
    %v1150 = vsub.f32 %v1113, %v1140
    %v1151 = vsub.f32 %v1116, %v1143
    %v1152 = vmul.f32 %v1144, 1.442695
    %v1153 = vpow.pop %v1152
    %v1154 = vmul.f32 %v1145, 1.442695
    %v1155 = vpow.pop %v1154
    %v1156 = vmul.f32 %v1146, 1.442695
    %v1157 = vpow.pop %v1156
    %v1158 = vmul.f32 %v1147, 1.442695
    %v1159 = vpow.pop %v1158
    %v1160 = vmul.f32 %v1148, 1.442695
    %v1161 = vpow.pop %v1160
    %v1162 = vmul.f32 %v1149, 1.442695
    %v1163 = vpow.pop %v1162
    %v1164 = vmul.f32 %v1150, 1.442695
    %v1165 = vpow.pop %v1164
    %v1166 = vmul.f32 %v1151, 1.442695
    %v1167 = vpow.pop %v1166
    %v1168 = vsel %vm1119, %v1153, 0.0
    %1169 = vadd.xlane.f32.xlu0 %v1168
    %v1170 = vpop.xlane.xlu0 %1169
    %v1171 = vsel %vm1119, %v1155, 0.0
    %1172 = vadd.xlane.f32.xlu0 %v1171
    %v1173 = vpop.xlane.xlu0 %1172
    %v1174 = vsel %vm1119, %v1157, 0.0
    %1175 = vadd.xlane.f32.xlu0 %v1174
    %v1176 = vpop.xlane.xlu0 %1175
    %v1177 = vsel %vm1119, %v1159, 0.0
    %1178 = vadd.xlane.f32.xlu0 %v1177
    %v1179 = vpop.xlane.xlu0 %1178
    %v1180 = vsel %vm1119, %v1161, 0.0
    %1181 = vadd.xlane.f32.xlu0 %v1180
    %v1182 = vpop.xlane.xlu0 %1181
    %v1183 = vsel %vm1119, %v1163, 0.0
    %1184 = vadd.xlane.f32.xlu0 %v1183
    %v1185 = vpop.xlane.xlu0 %1184
    %v1186 = vsel %vm1119, %v1165, 0.0
    %1187 = vadd.xlane.f32.xlu0 %v1186
    %v1188 = vpop.xlane.xlu0 %1187
    %v1189 = vsel %vm1119, %v1167, 0.0
    %1190 = vadd.xlane.f32.xlu0 %v1189
    %v1191 = vpop.xlane.xlu0 %1190
    %v1192 = vlog2.pop %v1170
    %v1193 = vmul.f32 %v1192, 0.6931472
    %v1194 = vlog2.pop %v1173
    %v1195 = vmul.f32 %v1194, 0.6931472
    %v1196 = vlog2.pop %v1176
    %v1197 = vmul.f32 %v1196, 0.6931472
    %v1198 = vlog2.pop %v1179
    %v1199 = vmul.f32 %v1198, 0.6931472
    %v1200 = vlog2.pop %v1182
    %v1201 = vmul.f32 %v1200, 0.6931472
    %v1202 = vlog2.pop %v1185
    %v1203 = vmul.f32 %v1202, 0.6931472
    %v1204 = vlog2.pop %v1188
    %v1205 = vmul.f32 %v1204, 0.6931472
    %v1206 = vlog2.pop %v1191
    %v1207 = vmul.f32 %v1206, 0.6931472
    %v1208 = vsub.f32 %v1144, %v1193
    %v1209 = vsub.f32 %v1145, %v1195
    %v1210 = vsub.f32 %v1146, %v1197
    %v1211 = vsub.f32 %v1147, %v1199
    %v1212 = vsub.f32 %v1148, %v1201
    %v1213 = vsub.f32 %v1149, %v1203
    %v1214 = vsub.f32 %v1150, %v1205
    %v1215 = vsub.f32 %v1151, %v1207
    %1216 = vst.msk [vmem:[%s9] sm:$0xff] %vm1119, %v1208
    %1217 = vst.msk [vmem:[%s9 + $0x8] sm:$0xff] %vm1119, %v1209
    %1218 = vst.msk [vmem:[%s9 + $0x10] sm:$0xff] %vm1119, %v1210
    %1219 = vst.msk [vmem:[%s9 + $0x18] sm:$0xff] %vm1119, %v1211
    %1220 = vst.msk [vmem:[%s9 + $0x20] sm:$0xff] %vm1119, %v1212
    %1221 = vst.msk [vmem:[%s9 + $0x28] sm:$0xff] %vm1119, %v1213
    %1222 = vst.msk [vmem:[%s9 + $0x30] sm:$0xff] %vm1119, %v1214
    %1223 = vst.msk [vmem:[%s9 + $0x38] sm:$0xff] %vm1119, %v1215
    // Predicated region
    $region50: #{net_forward.1} parent=1 // pred_check
      _
    $region51: #{net_forward.1} parent=1 // pred_check_branch
      %1225 = sbr.rel (0) target = $region53
    $region52: #{net_forward.1} parent=1 // pred_region
      _
    $region53: #{net_forward.1} parent=1 // pred_fallthru
      _
    // Predicated region
    $region54: #{net_forward.1} parent=1 // pred_check
      _
    $region55: #{net_forward.1} parent=1 // pred_check_branch
      %1227 = sbr.rel (0) target = $region57
    $region56: #{net_forward.1} parent=1 // pred_region
      _
    $region57: #{net_forward.1} parent=1 // pred_fallthru
      _
    %1228 = vsyncpa [#allocation3], 1
    %1229 = vsyncpa [#allocation5], 1

</llo_original>
